<compile_context>
chip_gen: v6e
topology: v6e:2x2x1
jax: 0.10.0
libtpu: 0.0.40
codegen_flags: <defaults>
</compile_context>

<pallas_src>
import functools
import math

import jax
import jax.numpy as jnp
from jax.experimental import pallas as pl
from jax.experimental.pallas import tpu as pltpu


def _default_vmem_limit():
    # v5e/v6e have 128 MiB physical VMEM -> allow up to 64 MiB scoped; v7x has
    # 64 MiB -> stay at 32 MiB.  Falls back to 32 MiB if the query fails.
    try:
        cap = int(pltpu.get_tpu_info().vmem_capacity_bytes)
    except Exception:
        cap = 64 * 1024 * 1024
    return int(min(64 * 1024 * 1024, max(32 * 1024 * 1024, cap // 2)))


_VMEM_LIMIT = _default_vmem_limit()


def _compiler_params(rank):
    return pltpu.CompilerParams(
        dimension_semantics=("parallel",) * rank,   # megacore sharding on v7x
        vmem_limit_bytes=_VMEM_LIMIT,
    )


def _pick_row_tile(h, wp, cin, target_rows=1024, scratch_budget=4 * 1024 * 1024):
    """Row tile th (dividing h) whose flattened M = th*wp is close to
    `target_rows`, keeps the im2col scratch under `scratch_budget`, and keeps
    th*wp bf16-sublane aligned unless the tile covers the whole image."""
    cap = max(wp, min(target_rows, scratch_budget // (9 * cin * 2)))
    valid = [t for t in range(1, h + 1)
             if h % t == 0 and (t == h or (t * wp) % 16 == 0)]
    fit = [t for t in valid if t * wp <= cap]
    return max(fit) if fit else min(valid)


def _pick_tile(total, target, align=16):
    cand = min(total, target)
    for t in range(cand, 0, -1):
        if total % t == 0 and (t == total or t % align == 0):
            return t
    return total


# ----------------------------------------------------------------------------
# Pallas kernels
# ----------------------------------------------------------------------------
def _conv3x3_kernel(x_ref, w_ref, b_ref, o_ref, patch_ref, *, th, wp, cin,
                    apply_relu):
    """3x3 / stride-1 / pad-1 conv for one (image, row-tile) grid point.

    All 9 taps are folded into the contraction dim via an in-kernel im2col into
    VMEM scratch, so every layer runs a single (M, 9*Cin) x (9*Cin, Cout) MXU
    matmul: full K fill on the 256-wide MXUs and no per-tap accumulator
    read-modify-write passes.

    x_ref:     (1, (H+3)*(W+2), Cin)  flat zero-padded image (resident)
    w_ref:     (9*Cin, Cout)          tap-major folded weights (resident)
    b_ref:     (1, Cout)              f32
    o_ref:     (1, th*(W+2), Cout)    flat output rows (2 junk cols per row,
                                      sliced off by the wrapper)
    patch_ref: (th*(W+2), 9*Cin)      bf16 im2col scratch
    """
    mt = th * wp
    h0 = pl.program_id(1) * th
    for dy in range(3):
        for dx in range(3):
            k = dy * 3 + dx
            start = (h0 + dy) * wp + dx
            patch_ref[:, k * cin:(k + 1) * cin] = x_ref[0, pl.ds(start, mt), :]
    acc = jnp.dot(patch_ref[...], w_ref[...], preferred_element_type=jnp.float32)
    acc = acc + b_ref[...]
    if apply_relu:
        acc = jnp.maximum(acc, 0.0)
    o_ref[0, :, :] = acc.astype(o_ref.dtype)


def _matmul_bias_act_kernel(x_ref, w_ref, b_ref, o_ref, *, apply_relu):
    """Fused im2col matmul + bias + optional ReLU (Cin=3 first conv).

    x_ref: (1, TM, K) bf16; w_ref: (K, Cout) bf16; b_ref: (1, Cout) f32
    o_ref: (1, TM, Cout)
    """
    acc = jnp.dot(x_ref[0, :, :], w_ref[...], preferred_element_type=jnp.float32)
    acc = acc + b_ref[...]
    if apply_relu:
        acc = jnp.maximum(acc, 0.0)
    o_ref[0, :, :] = acc.astype(o_ref.dtype)


def _relu_kernel(x_ref, o_ref):
    o_ref[...] = jnp.maximum(x_ref[...], 0.0)


def _maxpool2x2_kernel(x_ref, o_ref):
    """2x2 / stride-2 max pool on a tile of output rows.

    x_ref: (1, TH, 2, Wo, 2*C)  row pairs; adjacent column pairs packed on lanes
    o_ref: (1, TH, Wo, C)
    """
    c = o_ref.shape[3]
    r = jnp.maximum(x_ref[0, :, 0, :, :], x_ref[0, :, 1, :, :])   # (TH, Wo, 2C)
    o_ref[0, :, :, :] = jnp.maximum(r[:, :, :c], r[:, :, c:])


# ----------------------------------------------------------------------------
# Wrappers (glue: padding, free HBM reshapes, BlockSpecs)
# ----------------------------------------------------------------------------
def conv3x3(x, w, b, *, apply_relu=False):
    """x: (N,H,W,Cin) bf16, w: (3,3,Cin,Cout) bf16, b: (1,Cout) f32 -> (N,H,W,Cout)."""
    N, H, W, Cin = x.shape
    Cout = w.shape[3]
    if Cin < 8:                        # first layer: JAX-side im2col instead
        return _conv3x3_im2col(x, w, b, apply_relu=apply_relu)

    Wp = W + 2
    # One extra bottom padding row keeps the dy/dx-offset flat reads of the last
    # row tile in bounds.
    # TODO(synk): per-layer jnp.pad + junk-column slice each cost ~one HBM pass
    # of the activation; a padded inter-layer format would remove them.
    xp = jnp.pad(x, ((0, 0), (1, 2), (1, 1), (0, 0)))         # (N, H+3, Wp, Cin)
    xpf = xp.reshape(N, (H + 3) * Wp, Cin)                     # free reshape
    wf = w.reshape(9 * Cin, Cout)                              # tap-major K
    th = _pick_row_tile(H, Wp, Cin)
    mt = th * Wp

    kernel = functools.partial(_conv3x3_kernel, th=th, wp=Wp, cin=Cin,
                               apply_relu=apply_relu)
    cost = pl.CostEstimate(
        flops=2 * N * H * Wp * 9 * Cin * Cout,
        transcendentals=0,
        bytes_accessed=int(xpf.size) * 2 + int(wf.size) * 2 + int(b.size) * 4
        + N * H * Wp * Cout * 2,
    )
    # TODO(synk): Cout=64 layers still store a 64-wide last dim (masked vst); a
    # lane-dense 2-pixel x 128-lane output packing would widen the store path.
    out = pl.pallas_call(
        kernel,
        out_shape=jax.ShapeDtypeStruct((N, H * Wp, Cout), jnp.bfloat16),
        grid=(N, H // th),
        in_specs=[
            pl.BlockSpec((1, (H + 3) * Wp, Cin), lambda n, t: (n, 0, 0)),
            # TODO(synk): weights are constant across the grid; single-buffering
            # them (pl.Buffered(1)) would halve their VMEM footprint.
            pl.BlockSpec((9 * Cin, Cout), lambda n, t: (0, 0)),
            pl.BlockSpec((1, Cout), lambda n, t: (0, 0)),
        ],
        out_specs=pl.BlockSpec((1, mt, Cout), lambda n, t: (n, t, 0)),
        scratch_shapes=[pltpu.VMEM((mt, 9 * Cin), jnp.bfloat16)],
        compiler_params=_compiler_params(2),
        cost_estimate=cost,
    )(xpf, wf, b)
    # Drop the two junk columns produced by the flattened-padded-row trick.
    return out.reshape(N, H, Wp, Cout)[:, :, :W, :]


def _conv3x3_im2col(x, w, b, *, apply_relu):
    """First conv (Cin=3): im2col so K = 9*Cin = 27 (padded to 32), one matmul."""
    # TODO(synk): the 9-tap patch tensor is materialized by XLA in HBM; tiny for
    # Cin=3 but could be built in-kernel from the resident padded image.
    N, H, W, Cin = x.shape
    Cout = w.shape[3]
    xp = jnp.pad(x, ((0, 0), (1, 1), (1, 1), (0, 0)))
    taps = [xp[:, dy:dy + H, dx:dx + W, :] for dy in range(3) for dx in range(3)]
    patches = jnp.concatenate(taps, axis=-1)                   # (N,H,W,9*Cin)
    K = 9 * Cin
    Kp = -(-K // 32) * 32
    if Kp != K:
        patches = jnp.pad(patches, ((0, 0), (0, 0), (0, 0), (0, Kp - K)))
    wf = jnp.pad(w.reshape(K, Cout), ((0, Kp - K), (0, 0)))
    M = H * W
    patches = patches.reshape(N, M, Kp)                        # free reshape
    tm = _pick_tile(M, 1024)
    kernel = functools.partial(_matmul_bias_act_kernel, apply_relu=apply_relu)
    out = pl.pallas_call(
        kernel,
        out_shape=jax.ShapeDtypeStruct((N, M, Cout), jnp.bfloat16),
        grid=(N, M // tm),
        in_specs=[
            pl.BlockSpec((1, tm, Kp), lambda n, m: (n, m, 0)),
            pl.BlockSpec((Kp, Cout), lambda n, m: (0, 0)),
            pl.BlockSpec((1, Cout), lambda n, m: (0, 0)),
        ],
        out_specs=pl.BlockSpec((1, tm, Cout), lambda n, m: (n, m, 0)),
        compiler_params=_compiler_params(2),
    )(patches, wf, b)
    return out.reshape(N, H, W, Cout)


def relu(x):
    """Standalone ReLU (only used when a pre-ReLU conv output is requested)."""
    shape = x.shape
    C = shape[-1]
    R = math.prod(shape[:-1])
    tr = _pick_tile(R, 2048)
    out = pl.pallas_call(
        _relu_kernel,
        out_shape=jax.ShapeDtypeStruct((R, C), x.dtype),
        grid=(R // tr,),
        in_specs=[pl.BlockSpec((tr, C), lambda i: (i, 0))],
        out_specs=pl.BlockSpec((tr, C), lambda i: (i, 0)),
        compiler_params=_compiler_params(1),
    )(x.reshape(R, C))
    return out.reshape(shape)


def maxpool2x2(x):
    """x: (N,H,W,C) -> (N,H//2,W//2,C), window 2x2, stride 2."""
    N, H, W, C = x.shape
    assert H % 2 == 0 and W % 2 == 0
    Ho, Wo = H // 2, W // 2
    # Contiguous reshape (free in HBM): row pairs on one axis, adjacent column
    # pairs packed onto lanes.
    xr = x.reshape(N, Ho, 2, Wo, 2 * C)
    # ~0.5 MiB input slab per grid step (was: one output row per step).
    row_bytes = 2 * Wo * 2 * C * 2
    th = _pick_tile(Ho, max(1, (512 * 1024) // row_bytes), align=1)
    return pl.pallas_call(
        _maxpool2x2_kernel,
        out_shape=jax.ShapeDtypeStruct((N, Ho, Wo, C), x.dtype),
        grid=(N, Ho // th),
        in_specs=[pl.BlockSpec((1, th, 2, Wo, 2 * C),
                               lambda n, t: (n, t, 0, 0, 0))],
        out_specs=pl.BlockSpec((1, th, Wo, C), lambda n, t: (n, t, 0, 0)),
        compiler_params=_compiler_params(2),
    )(xr)


# ----------------------------------------------------------------------------
# VGG16 features[0:23] layer table (matches torchvision indexing exactly)
# ----------------------------------------------------------------------------
_VGG16_LAYERS = [
    ("conv", 0), ("relu", None), ("conv", 1), ("relu", None), ("pool", None),
    ("conv", 2), ("relu", None), ("conv", 3), ("relu", None), ("pool", None),
    ("conv", 4), ("relu", None), ("conv", 5), ("relu", None), ("conv", 6),
    ("relu", None), ("pool", None),
    ("conv", 7), ("relu", None), ("conv", 8), ("relu", None), ("conv", 9),
    ("relu", None),
]
_VGG16_CONV_CHANNELS = [(3, 64), (64, 64), (64, 128), (128, 128), (128, 256),
                        (256, 256), (256, 256), (256, 512), (512, 512), (512, 512)]


def init_vgg16_params(key):
    params = []
    for i, (cin, cout) in enumerate(_VGG16_CONV_CHANNELS):
        kw, kb = jax.random.split(jax.random.fold_in(key, i))
        w = jax.random.normal(kw, (3, 3, cin, cout), jnp.float32) * jnp.sqrt(
            2.0 / (9 * cin))
        b = jax.random.normal(kb, (cout,), jnp.float32) * 0.01
        # Weights stored bf16 (native MXU dtype, halves weight DMA); bias stays f32.
        params.append((w.astype(jnp.bfloat16), b.reshape(1, cout)))
    return params


def vgg16_forward(x_nchw, params, indices=None):
    """Pallas equivalent of Vgg16.forward (ReLU fused into conv where possible)."""
    if indices is None:
        indices = [3, 8, 15, 22]
    last = indices[-1]
    x = jnp.transpose(x_nchw, (0, 2, 3, 1)).astype(jnp.bfloat16)   # NCHW -> NHWC
    out = []
    skip_relu = set()
    for i in range(last + 1):
        kind, pidx = _VGG16_LAYERS[i]
        if kind == "conv":
            w, b = params[pidx]
            fuse = (i not in indices and i + 1 <= last
                    and _VGG16_LAYERS[i + 1][0] == "relu")
            x = conv3x3(x, w, b, apply_relu=fuse)
            if fuse:
                skip_relu.add(i + 1)
        elif kind == "relu":
            if i not in skip_relu:          # already applied in the conv epilogue
                x = relu(x)
        else:
            x = maxpool2x2(x)
        if i in indices:
            out.append(jnp.transpose(x, (0, 3, 1, 2)).astype(jnp.float32))
    return out


def vgg16_forward_ref(x_nchw, params, indices=None):
    """Pure-JAX f32 reference for correctness checking."""
    if indices is None:
        indices = [3, 8, 15, 22]
    x = jnp.transpose(x_nchw, (0, 2, 3, 1)).astype(jnp.float32)
    out = []
    for i in range(indices[-1] + 1):
        kind, pidx = _VGG16_LAYERS[i]
        if kind == "conv":
            w, b = params[pidx]
            cout = w.shape[3]
            x = jax.lax.conv_general_dilated(
                x, w.astype(jnp.float32), window_strides=(1, 1), padding="SAME",
                dimension_numbers=("NHWC", "HWIO", "NHWC")) + b.reshape(1, 1, 1, cout)
        elif kind == "relu":
            x = jnp.maximum(x, 0.0)
        else:
            x = jax.lax.reduce_window(x, -jnp.inf, jax.lax.max,
                                      (1, 2, 2, 1), (1, 2, 2, 1), "VALID")
        if i in indices:
            out.append(jnp.transpose(x, (0, 3, 1, 2)))
    return out


if __name__ == "__main__":
    key = jax.random.PRNGKey(0)
    kx, kp = jax.random.split(key)
    x = jax.random.normal(kx, (2, 3, 16, 16), jnp.float32)  # NCHW, like PyTorch
    params = init_vgg16_params(kp)

    outs = jax.block_until_ready(vgg16_forward(x, params))

    expected_shapes = [(2, 64, 16, 16), (2, 128, 8, 8), (2, 256, 4, 4), (2, 512, 2, 2)]
    assert [tuple(o.shape) for o in outs] == expected_shapes, \
        [tuple(o.shape) for o in outs]

    refs = vgg16_forward_ref(x, params)
    for o, r in zip(outs, refs):
        err = float(jnp.max(jnp.abs(o - r)))
        scale = float(jnp.max(jnp.abs(r))) + 1e-6
        assert err / scale < 5e-2, f"mismatch: relative max error {err / scale}"

    print("KERNEL_OK")
</pallas_src>

<mosaic_0001>
module attributes {stable_mosaic.version = 11 : i64} {
  func.func @_matmul_bias_act_kernel(%arg0: i32, %arg1: i32, %arg2: memref<1x256x32xbf16, #tpu.memory_space<vmem>>, %arg3: memref<32x64xbf16, #tpu.memory_space<vmem>>, %arg4: memref<1x64xf32, #tpu.memory_space<vmem>>, %arg5: memref<1x256x64xbf16, #tpu.memory_space<vmem>>) attributes {dimension_semantics = [#tpu.dimension_semantics<parallel>, #tpu.dimension_semantics<parallel>], iteration_bounds = array<i64: 2, 1>, scalar_prefetch = 0 : i64, scratch_operands = 0 : i64, tpu.core_type = #tpu.core_type<tc>, window_params = [{transform_indices = @transform_0, window_bounds = array<i64: 1, 256, 32>}, {pipeline_mode = #tpu.pipeline_mode<synchronous>, transform_indices = @transform_1, window_bounds = array<i64: 32, 64>}, {pipeline_mode = #tpu.pipeline_mode<synchronous>, transform_indices = @transform_2, window_bounds = array<i64: 1, 64>}, {transform_indices = @transform_3, window_bounds = array<i64: 1, 256, 64>}]} {
    %c0 = arith.constant 0 : index
    %c0_0 = arith.constant 0 : index
    %c0_1 = arith.constant 0 : index
    %0 = vector.load %arg2[%c0, %c0_0, %c0_1] : memref<1x256x32xbf16, #tpu.memory_space<vmem>>, vector<1x256x32xbf16>
    %1 = vector.shape_cast %0 : vector<1x256x32xbf16> to vector<256x32xbf16>
    %c0_2 = arith.constant 0 : index
    %c0_3 = arith.constant 0 : index
    %2 = vector.load %arg3[%c0_2, %c0_3] : memref<32x64xbf16, #tpu.memory_space<vmem>>, vector<32x64xbf16>
    %cst = arith.constant dense<0.000000e+00> : vector<256x64xf32>
    %3 = tpu.matmul %1, %2, %cst {dimension_numbers = #tpu.dot_dimension_numbers<[1], [0], [0], [1], [0, 0, 1, 1], [], []>} : vector<256x32xbf16>, vector<32x64xbf16>, vector<256x64xf32> -> vector<256x64xf32>
    %c0_4 = arith.constant 0 : index
    %c0_5 = arith.constant 0 : index
    %4 = vector.load %arg4[%c0_4, %c0_5] : memref<1x64xf32, #tpu.memory_space<vmem>>, vector<1x64xf32>
    %5 = vector.broadcast %4 : vector<1x64xf32> to vector<256x64xf32>
    %6 = arith.addf %3, %5 : vector<256x64xf32>
    %cst_6 = arith.constant 0.000000e+00 : f32
    %7 = vector.broadcast %cst_6 : f32 to vector<256x64xf32>
    %8 = arith.maximumf %6, %7 : vector<256x64xf32>
    %9 = arith.truncf %8 : vector<256x64xf32> to vector<256x64xbf16>
    %c0_7 = arith.constant 0 : index
    %c0_8 = arith.constant 0 : index
    %c0_9 = arith.constant 0 : index
    %10 = vector.load %arg5[%c0_7, %c0_8, %c0_9] : memref<1x256x64xbf16, #tpu.memory_space<vmem>>, vector<1x256x64xbf16>
    %11 = vector.shape_cast %10 : vector<1x256x64xbf16> to vector<256x64xbf16>
    %12 = vector.shape_cast %9 : vector<256x64xbf16> to vector<1x256x64xbf16>
    tpu.vector_store %arg5[%c0_7, %c0_8, %c0_9], %12 {strides = array<i32>} : memref<1x256x64xbf16, #tpu.memory_space<vmem>>, vector<1x256x64xbf16>,
    return
  }
  func.func @transform_0(%arg0: i32, %arg1: i32) -> (i32, i32, i32) {
    %c0_i32 = arith.constant 0 : i32
    %c0_i32_0 = arith.constant 0 : i32
    return %arg0, %arg1, %c0_i32 : i32, i32, i32
  }
  func.func @transform_1(%arg0: i32, %arg1: i32) -> (i32, i32) {
    %c0_i32 = arith.constant 0 : i32
    %c0_i32_0 = arith.constant 0 : i32
    %c0_i32_1 = arith.constant 0 : i32
    return %c0_i32, %c0_i32_0 : i32, i32
  }
  func.func @transform_2(%arg0: i32, %arg1: i32) -> (i32, i32) {
    %c0_i32 = arith.constant 0 : i32
    %c0_i32_0 = arith.constant 0 : i32
    %c0_i32_1 = arith.constant 0 : i32
    return %c0_i32, %c0_i32_0 : i32, i32
  }
  func.func @transform_3(%arg0: i32, %arg1: i32) -> (i32, i32, i32) {
    %c0_i32 = arith.constant 0 : i32
    %c0_i32_0 = arith.constant 0 : i32
    return %arg0, %arg1, %c0_i32 : i32, i32, i32
  }
}

</mosaic_0001>

<llo_original>
// kernel: tpu_custom_call.1
$region0: #{tpu_custom_call.1}
  #allocation0 [shape = 'u32[]', space=smem, size = 0x4, offset = 0x4, fixed_abs, tag = 'smem constant byte address 0x4 - core index']
  #allocation1 [shape = 'u32[144,128]{1,0:T(1,128)}', space=vmem, size = 0x12000, scoped, tag = 'internal scratch']
  %s0 = inlined_call_operand.vmem [shape: bf16[2,256,32], index: 0, kind: input, shape index: {}]
  %s1 = inlined_call_operand.vmem [shape: bf16[32,64], index: 1, kind: input, shape index: {}]
  %s2 = inlined_call_operand.vmem [shape: f32[1,64], index: 2, kind: input, shape index: {}]
  %s3 = inlined_call_operand.vmem [shape: bf16[2,256,64], index: 3, kind: output, shape index: {}]
  %s4 = sld [smem:[#allocation0]]
  $region45: #{tpu_custom_call.1} parent=0
    _
  %s6 = ssub.s32 1, %s4
  %s7 = scalar_select 0, %s6, %s4
  loop: start=0, step=1, limit=4
  $region2: #{tpu_custom_call.1} parent=0 // loop_pre_header
    _
  $region3: #{tpu_custom_call.1} parent=0 // loop_header
    %s9 = sphi 0, %s13
    %p10 = scmp.ge.s32.totalorder %s9, 4
    %s16 = sphi 0, %s28
    %s17 = sphi 0, %s24
    %s18 = sphi 0, %s16
    %s19 = sphi 0, %s17
    %s20 = sphi 0, %s18
    %s21 = sphi 0, %s19
    %s33 = sphi 0, %s35
    %s36 = sphi 0, %s33
    %s37 = sphi 0, %s36
    %s53 = sphi 0, %s37
    %s57 = sphi 0, %s57
    %s59 = sphi 0, %s57
    %s60 = sphi 0, %s59
    %s74 = sphi 0, %s60
    %s78 = sphi 0, %s78
    %s80 = sphi 0, %s78
    %s81 = sphi 0, %s80
    %s95 = sphi 0, %s81
    %s103 = sphi 0, %s105
    %s106 = sphi 0, %s103
    %s107 = sphi 0, %s106
    %s123 = sphi 0, %s107
  $region4: #{tpu_custom_call.1} parent=0 // loop_header_branch
    %12 = sbr.rel (%p10) target = $region8
  $region5: #{tpu_custom_call.1} parent=0 // loop_body
    %s14 = ssub.s32 %s9, 1
    %s15 = ssub.s32 %s9, 2
    %s22 = sadd.s32 1, %s17
    %p23 = scmp.ge.s32.totalorder %s22, 1
    %s24 = scalar_select %p23, 0, %s22
    %s25 = sadd.s32 1, %s16
    %s26 = scalar_select %p23, %s25, %s16
    %p27 = scmp.ge.s32.totalorder %s26, 2
    %s28 = scalar_select %p27, 0, %s26
    %s29 = ssub.s32 %s16, %s28
    %s30 = ssub.s32 %s17, %s24
    %s31 = sor.u32 %s29, %s30
    %p32 = scmp.eq.s32.totalorder %s31, 0
    %s34 = sadd.s32 %s33, 1
    %s35 = scalar_select %p32, %s33, %s34
    %p38 = pneg %p32
    %p39 = scmp.eq.s32.totalorder %s9, 1
    %p40 = por %p38, %p39
    %p41 = scmp.ne.s32.totalorder %s33, %s36
    %p42 = scmp.eq.s32.totalorder %s9, 0
    %p43 = por %p41, %p42
    %p44 = scmp.ne.s32.totalorder %s33, %s36
    %p45 = scmp.eq.s32.totalorder %s14, 1
    %p46 = por %p44, %p45
    %p47 = scmp.ne.s32.totalorder %s36, %s37
    %p48 = scmp.eq.s32.totalorder %s14, 0
    %p49 = por %p47, %p48
    %p50 = scmp.ne.s32.totalorder %s36, %s37
    %p51 = scmp.eq.s32.totalorder %s15, 1
    %p52 = por %p50, %p51
    %p54 = scmp.ne.s32.totalorder %s37, %s53
    %p55 = scmp.eq.s32.totalorder %s15, 0
    %p56 = por %p54, %p55
    %s58 = sadd.s32 %s57, 1
    %p61 = scmp.eq.s32.totalorder %s9, 1
    %p62 = scmp.ne.s32.totalorder %s57, %s59
    %p63 = scmp.eq.s32.totalorder %s9, 0
    %p64 = por %p62, %p63
    %p65 = scmp.ne.s32.totalorder %s57, %s59
    %p66 = scmp.eq.s32.totalorder %s14, 1
    %p67 = por %p65, %p66
    %p68 = scmp.ne.s32.totalorder %s59, %s60
    %p69 = scmp.eq.s32.totalorder %s14, 0
    %p70 = por %p68, %p69
    %p71 = scmp.ne.s32.totalorder %s59, %s60
    %p72 = scmp.eq.s32.totalorder %s15, 1
    %p73 = por %p71, %p72
    %p75 = scmp.ne.s32.totalorder %s60, %s74
    %p76 = scmp.eq.s32.totalorder %s15, 0
    %p77 = por %p75, %p76
    %s79 = sadd.s32 %s78, 1
    %p82 = scmp.eq.s32.totalorder %s9, 1
    %p83 = scmp.ne.s32.totalorder %s78, %s80
    %p84 = scmp.eq.s32.totalorder %s9, 0
    %p85 = por %p83, %p84
    %p86 = scmp.ne.s32.totalorder %s78, %s80
    %p87 = scmp.eq.s32.totalorder %s14, 1
    %p88 = por %p86, %p87
    %p89 = scmp.ne.s32.totalorder %s80, %s81
    %p90 = scmp.eq.s32.totalorder %s14, 0
    %p91 = por %p89, %p90
    %p92 = scmp.ne.s32.totalorder %s80, %s81
    %p93 = scmp.eq.s32.totalorder %s15, 1
    %p94 = por %p92, %p93
    %p96 = scmp.ne.s32.totalorder %s81, %s95
    %p97 = scmp.eq.s32.totalorder %s15, 0
    %p98 = por %p96, %p97
    %s99 = ssub.s32 %s16, %s28
    %s100 = ssub.s32 %s17, %s24
    %s101 = sor.u32 %s99, %s100
    %p102 = scmp.eq.s32.totalorder %s101, 0
    %s104 = sadd.s32 %s103, 1
    %s105 = scalar_select %p102, %s103, %s104
    %p108 = pneg %p102
    %p109 = scmp.eq.s32.totalorder %s9, 1
    %p110 = por %p108, %p109
    %p111 = scmp.ne.s32.totalorder %s103, %s106
    %p112 = scmp.eq.s32.totalorder %s9, 0
    %p113 = por %p111, %p112
    %p114 = scmp.ne.s32.totalorder %s103, %s106
    %p115 = scmp.eq.s32.totalorder %s14, 1
    %p116 = por %p114, %p115
    %p117 = scmp.ne.s32.totalorder %s106, %s107
    %p118 = scmp.eq.s32.totalorder %s14, 0
    %p119 = por %p117, %p118
    %p120 = scmp.ne.s32.totalorder %s106, %s107
    %p121 = scmp.eq.s32.totalorder %s15, 1
    %p122 = por %p120, %p121
    %p124 = scmp.ne.s32.totalorder %s107, %s123
    %p125 = scmp.eq.s32.totalorder %s15, 0
    %p126 = por %p124, %p125
    %p127 = scmp.le.s32.totalorder 1, %s9
    %p128 = scmp.lt.s32.totalorder %s9, 3
    %p129 = pnand %p127, %p128
    %p130 = pneg %p129
    // Predicated region
    $region9: #{tpu_custom_call.1} parent=5 // pred_check
      _
    $region10: #{tpu_custom_call.1} parent=5 // pred_check_branch
      %132 = sbr.rel (%p129) target = $region12
    $region11: #{tpu_custom_call.1} parent=5 // pred_region
      %s133 = ssub.s32 %s9, 1
      // Predicated region
      $region13: #{tpu_custom_call.1} parent=11 // pred_check
        %p134 = pneg %p70
      $region14: #{tpu_custom_call.1} parent=11 // pred_check_branch
        %136 = sbr.rel (%p134) target = $region16
      $region15: #{tpu_custom_call.1} parent=11 // pred_region
        _
      $region16: #{tpu_custom_call.1} parent=11 // pred_fallthru
        _
      // Predicated region
      $region17: #{tpu_custom_call.1} parent=11 // pred_check
        %p137 = pneg %p91
      $region18: #{tpu_custom_call.1} parent=11 // pred_check_branch
        %139 = sbr.rel (%p137) target = $region20
      $region19: #{tpu_custom_call.1} parent=11 // pred_region
        _
      $region20: #{tpu_custom_call.1} parent=11 // pred_fallthru
        _
    $region12: #{tpu_custom_call.1} parent=5 // pred_fallthru
      _
    %p140 = scmp.lt.s32.totalorder %s9, 2
    // Predicated region
    $region21: #{tpu_custom_call.1} parent=5 // pred_check
      %p141 = pneg %p140
    $region22: #{tpu_custom_call.1} parent=5 // pred_check_branch
      %143 = sbr.rel (%p141) target = $region24
    $region23: #{tpu_custom_call.1} parent=5 // pred_region
      // Predicated region
      $region25: #{tpu_custom_call.1} parent=23 // pred_check
        %p144 = pneg %p43
      $region26: #{tpu_custom_call.1} parent=23 // pred_check_branch
        %146 = sbr.rel (%p144) target = $region28
      $region27: #{tpu_custom_call.1} parent=23 // pred_region
        %s147 = smul.u32 32, %s17
        %p148 = scmp.lt.s32.totalorder %s16, 1
        %s149 = scalar_select %p148, %s16, 1
        %p150 = scmp.lt.s32.totalorder %s147, 31
        %s151 = scalar_select %p150, %s147, 31
        %s152 = smul.addr %s149, 32
        %s153 = sadd.s32 %s151, %s152
        %s154 = smul.addr %s153, 4
        %s155 = scalar_lea.vmem %s0, %s154
        %s156 = smul.u32 32, %s17
      $region28: #{tpu_custom_call.1} parent=23 // pred_fallthru
        _
    $region24: #{tpu_custom_call.1} parent=5 // pred_fallthru
      _
    %p157 = scmp.le.s32.totalorder 1, %s9
    %p158 = scmp.lt.s32.totalorder %s9, 3
    %p159 = pnand %p157, %p158
    %p160 = pneg %p159
    // Predicated region
    $region29: #{tpu_custom_call.1} parent=5 // pred_check
      _
    $region30: #{tpu_custom_call.1} parent=5 // pred_check_branch
      %162 = sbr.rel (%p159) target = $region32
    $region31: #{tpu_custom_call.1} parent=5 // pred_region
      %s163 = ssub.s32 %s9, 1
      %s164 = smul.u32 32, %s19
      %p165 = scmp.lt.s32.totalorder %s18, 1
      %s166 = scalar_select %p165, %s18, 1
      %p167 = scmp.lt.s32.totalorder %s164, 31
      %s168 = scalar_select %p167, %s164, 31
      %s169 = smul.addr %s166, 32
      %s170 = sadd.s32 %s168, %s169
      %s171 = smul.addr %s170, 4
      %s172 = scalar_lea.vmem %s0, %s171
      %p173 = pneg %p49
      %p174 = pneg %p46
      %p175 = pneg %p70
      %p176 = pneg %p67
      %p177 = pneg %p91
      %p178 = pneg %p88
      %p179 = pneg %p119
      %p180 = pneg %p116
      %s181 = smul.u32 32, %s19
      %p182 = scmp.lt.s32.totalorder %s18, 1
      %s183 = scalar_select %p182, %s18, 1
      %p184 = scmp.lt.s32.totalorder %s181, 31
      %s185 = scalar_select %p184, %s181, 31
      %s186 = smul.addr %s183, 32
      %s187 = sadd.s32 %s185, %s186
      %s188 = smul.addr %s187, 4
      %s189 = scalar_lea.vmem %s3, %s188
      %s190 = smul.u32 32, %s19
      %p191 = scmp.lt.s32.totalorder %s18, 1
      %s192 = scalar_select %p191, %s18, 1
      %p193 = scmp.lt.s32.totalorder %s190, 31
      %s194 = scalar_select %p193, %s190, 31
      %s195 = smul.addr %s192, 32
      %s196 = sadd.s32 %s194, %s195
      %s197 = smul.addr %s196, 4
      %s198 = scalar_lea.vmem %s0, %s197
      %s199 = smul.u32 32, %s19
      %s200 = smul.u32 32, %s19
      %p201 = scmp.lt.s32.totalorder %s18, 1
      %s202 = scalar_select %p201, %s18, 1
      %p203 = scmp.lt.s32.totalorder %s200, 31
      %s204 = scalar_select %p203, %s200, 31
      %s205 = smul.addr %s202, 32
      %s206 = sadd.s32 %s204, %s205
      %s207 = smul.addr %s206, 4
      %s208 = scalar_lea.vmem %s3, %s207
      %s209 = smul.u32 32, %s19
      %v211 = vld [vmem:[%s198] sm:$0xf]
      %v212 = vld [vmem:[%s198 + $0x4] sm:$0xf]
      %v213 = vld [vmem:[%s198 + $0x8] sm:$0xf]
      %v214 = vld [vmem:[%s198 + $0xc] sm:$0xf]
      %v215 = vld [vmem:[%s198 + $0x10] sm:$0xf]
      %v216 = vld [vmem:[%s198 + $0x14] sm:$0xf]
      %v217 = vld [vmem:[%s198 + $0x18] sm:$0xf]
      %v218 = vld [vmem:[%s198 + $0x1c] sm:$0xf]
      %v219 = vld [vmem:[%s198 + $0x20] sm:$0xf]
      %v220 = vld [vmem:[%s198 + $0x24] sm:$0xf]
      %v221 = vld [vmem:[%s198 + $0x28] sm:$0xf]
      %v222 = vld [vmem:[%s198 + $0x2c] sm:$0xf]
      %v223 = vld [vmem:[%s198 + $0x30] sm:$0xf]
      %v224 = vld [vmem:[%s198 + $0x34] sm:$0xf]
      %v225 = vld [vmem:[%s198 + $0x38] sm:$0xf]
      %v226 = vld [vmem:[%s198 + $0x3c] sm:$0xf]
      %v227 = vld [vmem:[%s198 + $0x40] sm:$0xf]
      %v228 = vld [vmem:[%s198 + $0x44] sm:$0xf]
      %v229 = vld [vmem:[%s198 + $0x48] sm:$0xf]
      %v230 = vld [vmem:[%s198 + $0x4c] sm:$0xf]
      %v231 = vld [vmem:[%s198 + $0x50] sm:$0xf]
      %v232 = vld [vmem:[%s198 + $0x54] sm:$0xf]
      %v233 = vld [vmem:[%s198 + $0x58] sm:$0xf]
      %v234 = vld [vmem:[%s198 + $0x5c] sm:$0xf]
      %v235 = vld [vmem:[%s198 + $0x60] sm:$0xf]
      %v236 = vld [vmem:[%s198 + $0x64] sm:$0xf]
      %v237 = vld [vmem:[%s198 + $0x68] sm:$0xf]
      %v238 = vld [vmem:[%s198 + $0x6c] sm:$0xf]
      %v239 = vld [vmem:[%s198 + $0x70] sm:$0xf]
      %v240 = vld [vmem:[%s198 + $0x74] sm:$0xf]
      %v241 = vld [vmem:[%s198 + $0x78] sm:$0xf]
      %v242 = vld [vmem:[%s198 + $0x7c] sm:$0xf]
      %v243 = vld [vmem:[%s1] sm:$0xf]
      %v244 = vld [vmem:[%s1 + $0x4] sm:$0xf]
      %v245 = vld [vmem:[%s1 + $0x8] sm:$0xf]
      %v246 = vld [vmem:[%s1 + $0xc] sm:$0xf]
      %v247 = vld [vmem:[%s2] sm:$0x1]
      %v249 = vlaneseq
      %v250 = vshrl.u32 %v249, 7
      %v251 = vsub.s32 0, %v250
      %v252 = vrot.slane %v247, %v251
      %v286 = vunpack.c.l.b16 %v211
      %v287 = vunpack.c.l.b16 %v212
      %v288 = vunpack.c.l.b16 %v213
      %v289 = vunpack.c.l.b16 %v214
      %v290 = vunpack.c.l.b16 %v215
      %v291 = vunpack.c.l.b16 %v216
      %v292 = vunpack.c.l.b16 %v217
      %v293 = vunpack.c.l.b16 %v218
      %v294 = vunpack.c.l.b16 %v219
      %v295 = vunpack.c.l.b16 %v220
      %v296 = vunpack.c.l.b16 %v221
      %v297 = vunpack.c.l.b16 %v222
      %v298 = vunpack.c.l.b16 %v223
      %v299 = vunpack.c.l.b16 %v224
      %v300 = vunpack.c.l.b16 %v225
      %v301 = vunpack.c.l.b16 %v226
      %v302 = vunpack.c.l.b16 %v227
      %v303 = vunpack.c.l.b16 %v228
      %v304 = vunpack.c.l.b16 %v229
      %v305 = vunpack.c.l.b16 %v230
      %v306 = vunpack.c.l.b16 %v231
      %v307 = vunpack.c.l.b16 %v232
      %v308 = vunpack.c.l.b16 %v233
      %v309 = vunpack.c.l.b16 %v234
      %v310 = vunpack.c.l.b16 %v235
      %v311 = vunpack.c.l.b16 %v236
      %v312 = vunpack.c.l.b16 %v237
      %v313 = vunpack.c.l.b16 %v238
      %v314 = vunpack.c.l.b16 %v239
      %v315 = vunpack.c.l.b16 %v240
      %v316 = vunpack.c.l.b16 %v241
      %v317 = vunpack.c.l.b16 %v242
      %v318 = vpack.c.b16 %v287, %v286
      %v319 = vpack.c.b16 %v289, %v288
      %v320 = vpack.c.b16 %v291, %v290
      %v321 = vpack.c.b16 %v293, %v292
      %v322 = vpack.c.b16 %v295, %v294
      %v323 = vpack.c.b16 %v297, %v296
      %v324 = vpack.c.b16 %v299, %v298
      %v325 = vpack.c.b16 %v301, %v300
      %v326 = vpack.c.b16 %v303, %v302
      %v327 = vpack.c.b16 %v305, %v304
      %v328 = vpack.c.b16 %v307, %v306
      %v329 = vpack.c.b16 %v309, %v308
      %v330 = vpack.c.b16 %v311, %v310
      %v331 = vpack.c.b16 %v313, %v312
      %v332 = vpack.c.b16 %v315, %v314
      %v333 = vpack.c.b16 %v317, %v316
      %v338 = vunpack.c.l.b16 %v243
      %v339 = vunpack.c.l.b16 %v244
      %v340 = vunpack.c.l.b16 %v245
      %v341 = vunpack.c.l.b16 %v246
      %v342 = vpack.c.b16 %v339, %v338
      %v343 = vpack.c.b16 %v341, %v340
      %vm346 = vcmask 261120
      %v348 = vsel %vm346, %v318, 0
      %v351 = vsel %vm346, %v319, 0
      %v354 = vsel %vm346, %v320, 0
      %v357 = vsel %vm346, %v321, 0
      %v360 = vsel %vm346, %v322, 0
      %v363 = vsel %vm346, %v323, 0
      %v366 = vsel %vm346, %v324, 0
      %v369 = vsel %vm346, %v325, 0
      %v372 = vsel %vm346, %v326, 0
      %v375 = vsel %vm346, %v327, 0
      %v378 = vsel %vm346, %v328, 0
      %v381 = vsel %vm346, %v329, 0
      %v384 = vsel %vm346, %v330, 0
      %v387 = vsel %vm346, %v331, 0
      %v390 = vsel %vm346, %v332, 0
      %v393 = vsel %vm346, %v333, 0
      %395 = vmatprep.subr.bf16.mxu0 0
      %396 = vmatpush1.bf16.msra.mxu0 0
      %397 = vmatprep.subr.bf16.mxu0 0
      %398 = vmatpush1.bf16.msra.mxu0 0
      %399 = vmatprep.subr.bf16.mxu0 0
      %400 = vmatpush1.bf16.msra.mxu0 0
      %401 = vmatprep.subr.bf16.mxu0 0
      %402 = vmatpush1.bf16.msra.mxu0 0
      %403 = vmatprep.subr.bf16.mxu0 0
      %404 = vmatpush1.bf16.msra.mxu0 0
      %405 = vmatprep.subr.bf16.mxu0 0
      %406 = vmatpush1.bf16.msra.mxu0 0
      %407 = vmatprep.subr.bf16.mxu0 0
      %408 = vmatpush1.bf16.msra.mxu0 %v343
      %409 = vmatprep.subr.bf16.mxu0 0
      %410 = vmatpush1.bf16.msra.mxu0 %v342
      %411 = vmatprep.subr.bf16.mxu0 0
      %412 = vmatpush2.bf16.msra.mxu0 0
      %413 = vmatprep.subr.bf16.mxu0 0
      %414 = vmatpush2.bf16.msra.mxu0 0
      %415 = vmatprep.subr.bf16.mxu0 0
      %416 = vmatpush2.bf16.msra.mxu0 0
      %417 = vmatprep.subr.bf16.mxu0 0
      %418 = vmatpush2.bf16.msra.mxu0 0
      %419 = vmatprep.subr.bf16.mxu0 0
      %420 = vmatpush2.bf16.msra.mxu0 0
      %421 = vmatprep.subr.bf16.mxu0 0
      %422 = vmatpush2.bf16.msra.mxu0 0
      %423 = vmatprep.subr.bf16.mxu0 0
      %424 = vmatpush2.bf16.msra.mxu0 0
      %425 = vmatprep.subr.bf16.mxu0 0
      %426 = vmatpush2.bf16.msra.mxu0 0
      %427 = vmatprep.mubr.bf16.mxu0 0
      %428 = vmatmul.mubr.bf16.gmra.mxu0 %v348
      %v429 = vpop.f32.mrf.mxu0
      %v430 = vadd.f32 %v252, %v429
      %v431 = vpop.f32.mrf.mxu0
      %v432 = vpop.f32.mrf.mxu0
      %v433 = vadd.f32 %v252, %v432
      %v434 = vpop.f32.mrf.mxu0
      %435 = vmatprep.mubr.bf16.mxu0 0
      %436 = vmatmul.mubr.bf16.gmra.mxu0 %v351
      %v437 = vpop.f32.mrf.mxu0
      %v438 = vadd.f32 %v252, %v437
      %v439 = vpop.f32.mrf.mxu0
      %v440 = vpop.f32.mrf.mxu0
      %v441 = vadd.f32 %v252, %v440
      %v442 = vpop.f32.mrf.mxu0
      %443 = vmatprep.mubr.bf16.mxu0 0
      %444 = vmatmul.mubr.bf16.gmra.mxu0 %v354
      %v445 = vpop.f32.mrf.mxu0
      %v446 = vadd.f32 %v252, %v445
      %v447 = vpop.f32.mrf.mxu0
      %v448 = vpop.f32.mrf.mxu0
      %v449 = vadd.f32 %v252, %v448
      %v450 = vpop.f32.mrf.mxu0
      %451 = vmatprep.mubr.bf16.mxu0 0
      %452 = vmatmul.mubr.bf16.gmra.mxu0 %v357
      %v453 = vpop.f32.mrf.mxu0
      %v454 = vadd.f32 %v252, %v453
      %v455 = vpop.f32.mrf.mxu0
      %v456 = vpop.f32.mrf.mxu0
      %v457 = vadd.f32 %v252, %v456
      %v458 = vpop.f32.mrf.mxu0
      %459 = vmatprep.mubr.bf16.mxu0 0
      %460 = vmatmul.mubr.bf16.gmra.mxu0 %v360
      %v461 = vpop.f32.mrf.mxu0
      %v462 = vadd.f32 %v252, %v461
      %v463 = vpop.f32.mrf.mxu0
      %v464 = vpop.f32.mrf.mxu0
      %v465 = vadd.f32 %v252, %v464
      %v466 = vpop.f32.mrf.mxu0
      %467 = vmatprep.mubr.bf16.mxu0 0
      %468 = vmatmul.mubr.bf16.gmra.mxu0 %v363
      %v469 = vpop.f32.mrf.mxu0
      %v470 = vadd.f32 %v252, %v469
      %v471 = vpop.f32.mrf.mxu0
      %v472 = vpop.f32.mrf.mxu0
      %v473 = vadd.f32 %v252, %v472
      %v474 = vpop.f32.mrf.mxu0
      %475 = vmatprep.mubr.bf16.mxu0 0
      %476 = vmatmul.mubr.bf16.gmra.mxu0 %v366
      %v477 = vpop.f32.mrf.mxu0
      %v478 = vadd.f32 %v252, %v477
      %v479 = vpop.f32.mrf.mxu0
      %v480 = vpop.f32.mrf.mxu0
      %v481 = vadd.f32 %v252, %v480
      %v482 = vpop.f32.mrf.mxu0
      %483 = vmatprep.mubr.bf16.mxu0 0
      %484 = vmatmul.mubr.bf16.gmra.mxu0 %v369
      %v485 = vpop.f32.mrf.mxu0
      %v486 = vadd.f32 %v252, %v485
      %v487 = vpop.f32.mrf.mxu0
      %v488 = vpop.f32.mrf.mxu0
      %v489 = vadd.f32 %v252, %v488
      %v490 = vpop.f32.mrf.mxu0
      %491 = vmatprep.mubr.bf16.mxu0 0
      %492 = vmatmul.mubr.bf16.gmra.mxu0 %v372
      %v493 = vpop.f32.mrf.mxu0
      %v494 = vadd.f32 %v252, %v493
      %v495 = vpop.f32.mrf.mxu0
      %v496 = vpop.f32.mrf.mxu0
      %v497 = vadd.f32 %v252, %v496
      %v498 = vpop.f32.mrf.mxu0
      %499 = vmatprep.mubr.bf16.mxu0 0
      %500 = vmatmul.mubr.bf16.gmra.mxu0 %v375
      %v501 = vpop.f32.mrf.mxu0
      %v502 = vadd.f32 %v252, %v501
      %v503 = vpop.f32.mrf.mxu0
      %v504 = vpop.f32.mrf.mxu0
      %v505 = vadd.f32 %v252, %v504
      %v506 = vpop.f32.mrf.mxu0
      %507 = vmatprep.mubr.bf16.mxu0 0
      %508 = vmatmul.mubr.bf16.gmra.mxu0 %v378
      %v509 = vpop.f32.mrf.mxu0
      %v510 = vadd.f32 %v252, %v509
      %v511 = vpop.f32.mrf.mxu0
      %v512 = vpop.f32.mrf.mxu0
      %v513 = vadd.f32 %v252, %v512
      %v514 = vpop.f32.mrf.mxu0
      %515 = vmatprep.mubr.bf16.mxu0 0
      %516 = vmatmul.mubr.bf16.gmra.mxu0 %v381
      %v517 = vpop.f32.mrf.mxu0
      %v518 = vadd.f32 %v252, %v517
      %v519 = vpop.f32.mrf.mxu0
      %v520 = vpop.f32.mrf.mxu0
      %v521 = vadd.f32 %v252, %v520
      %v522 = vpop.f32.mrf.mxu0
      %523 = vmatprep.mubr.bf16.mxu0 0
      %524 = vmatmul.mubr.bf16.gmra.mxu0 %v384
      %v525 = vpop.f32.mrf.mxu0
      %v526 = vadd.f32 %v252, %v525
      %v527 = vpop.f32.mrf.mxu0
      %v528 = vpop.f32.mrf.mxu0
      %v529 = vadd.f32 %v252, %v528
      %v530 = vpop.f32.mrf.mxu0
      %531 = vmatprep.mubr.bf16.mxu0 0
      %532 = vmatmul.mubr.bf16.gmra.mxu0 %v387
      %v533 = vpop.f32.mrf.mxu0
      %v534 = vadd.f32 %v252, %v533
      %v535 = vpop.f32.mrf.mxu0
      %v536 = vpop.f32.mrf.mxu0
      %v537 = vadd.f32 %v252, %v536
      %v538 = vpop.f32.mrf.mxu0
      %539 = vmatprep.mubr.bf16.mxu0 0
      %540 = vmatmul.mubr.bf16.gmra.mxu0 %v390
      %v541 = vpop.f32.mrf.mxu0
      %v542 = vadd.f32 %v252, %v541
      %v543 = vpop.f32.mrf.mxu0
      %v544 = vpop.f32.mrf.mxu0
      %v545 = vadd.f32 %v252, %v544
      %v546 = vpop.f32.mrf.mxu0
      %547 = vmatprep.mubr.bf16.mxu0 0
      %548 = vmatmul.mubr.bf16.gmra.mxu0 %v393
      %v549 = vpop.f32.mrf.mxu0
      %v550 = vadd.f32 %v252, %v549
      %v551 = vpop.f32.mrf.mxu0
      %v552 = vpop.f32.mrf.mxu0
      %v553 = vadd.f32 %v252, %v552
      %v554 = vpop.f32.mrf.mxu0
      %555 = vdwg.mxu0
      %v556 = vmax.f32 %v430, 0.0
      %v557 = vmax.f32 %v433, 0.0
      %v558 = vmax.f32 %v438, 0.0
      %v559 = vmax.f32 %v441, 0.0
      %v560 = vmax.f32 %v446, 0.0
      %v561 = vmax.f32 %v449, 0.0
      %v562 = vmax.f32 %v454, 0.0
      %v563 = vmax.f32 %v457, 0.0
      %v564 = vmax.f32 %v462, 0.0
      %v565 = vmax.f32 %v465, 0.0
      %v566 = vmax.f32 %v470, 0.0
      %v567 = vmax.f32 %v473, 0.0
      %v568 = vmax.f32 %v478, 0.0
      %v569 = vmax.f32 %v481, 0.0
      %v570 = vmax.f32 %v486, 0.0
      %v571 = vmax.f32 %v489, 0.0
      %v572 = vmax.f32 %v494, 0.0
      %v573 = vmax.f32 %v497, 0.0
      %v574 = vmax.f32 %v502, 0.0
      %v575 = vmax.f32 %v505, 0.0
      %v576 = vmax.f32 %v510, 0.0
      %v577 = vmax.f32 %v513, 0.0
      %v578 = vmax.f32 %v518, 0.0
      %v579 = vmax.f32 %v521, 0.0
      %v580 = vmax.f32 %v526, 0.0
      %v581 = vmax.f32 %v529, 0.0
      %v582 = vmax.f32 %v534, 0.0
      %v583 = vmax.f32 %v537, 0.0
      %v584 = vmax.f32 %v542, 0.0
      %v585 = vmax.f32 %v545, 0.0
      %v586 = vmax.f32 %v550, 0.0
      %v587 = vmax.f32 %v553, 0.0
      %v588 = vpack.c.bf16 %v557, %v556
      %v589 = vpack.c.bf16 %v559, %v558
      %v590 = vpack.c.bf16 %v561, %v560
      %v591 = vpack.c.bf16 %v563, %v562
      %v592 = vpack.c.bf16 %v565, %v564
      %v593 = vpack.c.bf16 %v567, %v566
      %v594 = vpack.c.bf16 %v569, %v568
      %v595 = vpack.c.bf16 %v571, %v570
      %v596 = vpack.c.bf16 %v573, %v572
      %v597 = vpack.c.bf16 %v575, %v574
      %v598 = vpack.c.bf16 %v577, %v576
      %v599 = vpack.c.bf16 %v579, %v578
      %v600 = vpack.c.bf16 %v581, %v580
      %v601 = vpack.c.bf16 %v583, %v582
      %v602 = vpack.c.bf16 %v585, %v584
      %v603 = vpack.c.bf16 %v587, %v586
      %v620 = vunpack.c.l.b16 %v588
      %v621 = vunpack.c.h.b16 %v588
      %v622 = vunpack.c.l.b16 %v589
      %v623 = vunpack.c.h.b16 %v589
      %v624 = vunpack.c.l.b16 %v590
      %v625 = vunpack.c.h.b16 %v590
      %v626 = vunpack.c.l.b16 %v591
      %v627 = vunpack.c.h.b16 %v591
      %v628 = vunpack.c.l.b16 %v592
      %v629 = vunpack.c.h.b16 %v592
      %v630 = vunpack.c.l.b16 %v593
      %v631 = vunpack.c.h.b16 %v593
      %v632 = vunpack.c.l.b16 %v594
      %v633 = vunpack.c.h.b16 %v594
      %v634 = vunpack.c.l.b16 %v595
      %v635 = vunpack.c.h.b16 %v595
      %v636 = vunpack.c.l.b16 %v596
      %v637 = vunpack.c.h.b16 %v596
      %v638 = vunpack.c.l.b16 %v597
      %v639 = vunpack.c.h.b16 %v597
      %v640 = vunpack.c.l.b16 %v598
      %v641 = vunpack.c.h.b16 %v598
      %v642 = vunpack.c.l.b16 %v599
      %v643 = vunpack.c.h.b16 %v599
      %v644 = vunpack.c.l.b16 %v600
      %v645 = vunpack.c.h.b16 %v600
      %v646 = vunpack.c.l.b16 %v601
      %v647 = vunpack.c.h.b16 %v601
      %v648 = vunpack.c.l.b16 %v602
      %v649 = vunpack.c.h.b16 %v602
      %v650 = vunpack.c.l.b16 %v603
      %v651 = vunpack.c.h.b16 %v603
      %v652 = vpack.c.b16 %v620, %v620
      %v653 = vpack.c.b16 %v621, %v621
      %v654 = vpack.c.b16 %v622, %v622
      %v655 = vpack.c.b16 %v623, %v623
      %v656 = vpack.c.b16 %v624, %v624
      %v657 = vpack.c.b16 %v625, %v625
      %v658 = vpack.c.b16 %v626, %v626
      %v659 = vpack.c.b16 %v627, %v627
      %v660 = vpack.c.b16 %v628, %v628
      %v661 = vpack.c.b16 %v629, %v629
      %v662 = vpack.c.b16 %v630, %v630
      %v663 = vpack.c.b16 %v631, %v631
      %v664 = vpack.c.b16 %v632, %v632
      %v665 = vpack.c.b16 %v633, %v633
      %v666 = vpack.c.b16 %v634, %v634
      %v667 = vpack.c.b16 %v635, %v635
      %v668 = vpack.c.b16 %v636, %v636
      %v669 = vpack.c.b16 %v637, %v637
      %v670 = vpack.c.b16 %v638, %v638
      %v671 = vpack.c.b16 %v639, %v639
      %v672 = vpack.c.b16 %v640, %v640
      %v673 = vpack.c.b16 %v641, %v641
      %v674 = vpack.c.b16 %v642, %v642
      %v675 = vpack.c.b16 %v643, %v643
      %v676 = vpack.c.b16 %v644, %v644
      %v677 = vpack.c.b16 %v645, %v645
      %v678 = vpack.c.b16 %v646, %v646
      %v679 = vpack.c.b16 %v647, %v647
      %v680 = vpack.c.b16 %v648, %v648
      %v681 = vpack.c.b16 %v649, %v649
      %v682 = vpack.c.b16 %v650, %v650
      %v683 = vpack.c.b16 %v651, %v651
      %vm716 = vcmask 519168
      %717 = vst.msk [vmem:[%s208] sm:$0xf] %vm716, %v652
      %718 = vst.msk [vmem:[%s208 + $0x4] sm:$0xf] %vm716, %v653
      %719 = vst.msk [vmem:[%s208 + $0x8] sm:$0xf] %vm716, %v654
      %720 = vst.msk [vmem:[%s208 + $0xc] sm:$0xf] %vm716, %v655
      %721 = vst.msk [vmem:[%s208 + $0x10] sm:$0xf] %vm716, %v656
      %722 = vst.msk [vmem:[%s208 + $0x14] sm:$0xf] %vm716, %v657
      %723 = vst.msk [vmem:[%s208 + $0x18] sm:$0xf] %vm716, %v658
      %724 = vst.msk [vmem:[%s208 + $0x1c] sm:$0xf] %vm716, %v659
      %725 = vst.msk [vmem:[%s208 + $0x20] sm:$0xf] %vm716, %v660
      %726 = vst.msk [vmem:[%s208 + $0x24] sm:$0xf] %vm716, %v661
      %727 = vst.msk [vmem:[%s208 + $0x28] sm:$0xf] %vm716, %v662
      %728 = vst.msk [vmem:[%s208 + $0x2c] sm:$0xf] %vm716, %v663
      %729 = vst.msk [vmem:[%s208 + $0x30] sm:$0xf] %vm716, %v664
      %730 = vst.msk [vmem:[%s208 + $0x34] sm:$0xf] %vm716, %v665
      %731 = vst.msk [vmem:[%s208 + $0x38] sm:$0xf] %vm716, %v666
      %732 = vst.msk [vmem:[%s208 + $0x3c] sm:$0xf] %vm716, %v667
      %733 = vst.msk [vmem:[%s208 + $0x40] sm:$0xf] %vm716, %v668
      %734 = vst.msk [vmem:[%s208 + $0x44] sm:$0xf] %vm716, %v669
      %735 = vst.msk [vmem:[%s208 + $0x48] sm:$0xf] %vm716, %v670
      %736 = vst.msk [vmem:[%s208 + $0x4c] sm:$0xf] %vm716, %v671
      %737 = vst.msk [vmem:[%s208 + $0x50] sm:$0xf] %vm716, %v672
      %738 = vst.msk [vmem:[%s208 + $0x54] sm:$0xf] %vm716, %v673
      %739 = vst.msk [vmem:[%s208 + $0x58] sm:$0xf] %vm716, %v674
      %740 = vst.msk [vmem:[%s208 + $0x5c] sm:$0xf] %vm716, %v675
      %741 = vst.msk [vmem:[%s208 + $0x60] sm:$0xf] %vm716, %v676
      %742 = vst.msk [vmem:[%s208 + $0x64] sm:$0xf] %vm716, %v677
      %743 = vst.msk [vmem:[%s208 + $0x68] sm:$0xf] %vm716, %v678
      %744 = vst.msk [vmem:[%s208 + $0x6c] sm:$0xf] %vm716, %v679
      %745 = vst.msk [vmem:[%s208 + $0x70] sm:$0xf] %vm716, %v680
      %746 = vst.msk [vmem:[%s208 + $0x74] sm:$0xf] %vm716, %v681
      %747 = vst.msk [vmem:[%s208 + $0x78] sm:$0xf] %vm716, %v682
      %748 = vst.msk [vmem:[%s208 + $0x7c] sm:$0xf] %vm716, %v683
      %s749 = smul.u32 32, %s19
      %p750 = scmp.lt.s32.totalorder %s18, 1
      %s751 = scalar_select %p750, %s18, 1
      %p752 = scmp.lt.s32.totalorder %s749, 31
      %s753 = scalar_select %p752, %s749, 31
      %s754 = smul.addr %s751, 32
      %s755 = sadd.s32 %s753, %s754
      %s756 = smul.addr %s755, 4
      %s757 = scalar_lea.vmem %s3, %s756
      // Predicated region
      $region33: #{tpu_custom_call.1} parent=31 // pred_check
        %p758 = pneg %p116
      $region34: #{tpu_custom_call.1} parent=31 // pred_check_branch
        %760 = sbr.rel (%p758) target = $region36
      $region35: #{tpu_custom_call.1} parent=31 // pred_region
        %s761 = smul.u32 32, %s19
      $region36: #{tpu_custom_call.1} parent=31 // pred_fallthru
        _
    $region32: #{tpu_custom_call.1} parent=5 // pred_fallthru
      _
    %p762 = scmp.le.s32.totalorder 2, %s9
    // Predicated region
    $region37: #{tpu_custom_call.1} parent=5 // pred_check
      %p763 = pneg %p762
    $region38: #{tpu_custom_call.1} parent=5 // pred_check_branch
      %765 = sbr.rel (%p763) target = $region40
    $region39: #{tpu_custom_call.1} parent=5 // pred_region
      %s766 = ssub.s32 %s9, 2
      // Predicated region
      $region41: #{tpu_custom_call.1} parent=39 // pred_check
        %p767 = pneg %p122
      $region42: #{tpu_custom_call.1} parent=39 // pred_check_branch
        %769 = sbr.rel (%p767) target = $region44
      $region43: #{tpu_custom_call.1} parent=39 // pred_region
        %s770 = smul.u32 32, %s21
        %p771 = scmp.lt.s32.totalorder %s20, 1
        %s772 = scalar_select %p771, %s20, 1
        %p773 = scmp.lt.s32.totalorder %s770, 31
        %s774 = scalar_select %p773, %s770, 31
        %s775 = smul.addr %s772, 32
        %s776 = sadd.s32 %s774, %s775
        %s777 = smul.addr %s776, 4
        %s778 = scalar_lea.vmem %s3, %s777
      $region44: #{tpu_custom_call.1} parent=39 // pred_fallthru
        _
    $region40: #{tpu_custom_call.1} parent=5 // pred_fallthru
      _
  $region6: #{tpu_custom_call.1} parent=0 // loop_footer
    %s13 = sadd.s32 1, %s9
  $region7: #{tpu_custom_call.1} parent=0 // loop_footer_branch
    %8 = sbr.rel target = $region3
  $region8: #{tpu_custom_call.1} parent=0 // loop_exit
    _

</llo_original>
